<compile_context>
chip_gen: v7x
topology: tpu7x:2x2x1
jax: 0.10.0
libtpu: 0.0.40
codegen_flags: <defaults>
</compile_context>

<pallas_src>
import math

import jax
import jax.numpy as jnp
from jax import lax
from jax.experimental import pallas as pl
from jax.experimental.pallas import tpu as pltpu

_INV_SQRT2 = 1.0 / math.sqrt(2.0)
_IN_FEATURES = 16
_OUT_FEATURES = 4
_PACK = 128 // _OUT_FEATURES          # 32 x-rows per lane-dense output row
_PACKED_IN = _PACK * _IN_FEATURES     # 512
_PACKED_OUT = _PACK * _OUT_FEATURES   # 128


def _make_kernel(precision):
    def _linear_gelu_kernel(x_ref, w_ref, b_ref, o_ref):
        # Fused linear + bias + exact GELU on one lane-dense tile.
        y = jnp.dot(x_ref[...], w_ref[...],
                    preferred_element_type=jnp.float32,
                    precision=precision)
        y = y + b_ref[...]
        # Exact GELU (nn.GELU default, approximate='none'):
        #   gelu(y) = 0.5 * y * (1 + erf(y / sqrt(2)))   (erf -> EUP slot)
        o_ref[...] = (0.5 * y * (1.0 + lax.erf(y * _INV_SQRT2))).astype(o_ref.dtype)
    return _linear_gelu_kernel


def pack_linear_gelu_params(w, b):
    """Expand nn.Linear(16, 4) params to the lane-dense block-diagonal form.

    w: [4, 16] (PyTorch (out, in) layout), b: [4]
      -> (w_big [512, 128], b_big [1, 128]).
    Hoisted out of the per-call path: compute once per weight and reuse.
    """
    assert w.shape == (_OUT_FEATURES, _IN_FEATURES)
    assert b.shape == (_OUT_FEATURES,)
    w_big = jnp.kron(jnp.eye(_PACK, dtype=jnp.float32), w.T.astype(jnp.float32))
    b_big = jnp.tile(b.astype(jnp.float32), _PACK).reshape(1, _PACKED_OUT)
    return w_big, b_big


def _default_tile_rows():
    """Biggest double-buffered (tile_r, 512)+(tile_r, 128) f32 slab that fits
    the default scoped-VMEM budget of the current generation.

      v5e: 16 MiB default scope            -> 2048 rows (~10.5 MiB)
      v6e: 32 MiB default scope (128 phys) -> 4096 rows (~20.5 MiB)
      v7x: 32 MiB default scope ( 64 phys) -> 4096 rows (headroom kept for 2 TCs)
    """
    try:
        kind = jax.devices()[0].device_kind.lower()
    except Exception:  # pragma: no cover - e.g. interpret mode / no device
        return 2048
    if ("v6" in kind) or ("v7" in kind) or ("7x" in kind):
        return 4096
    return 2048  # v5e and anything older: stay inside the 16 MiB default scope


def linear_gelu_packed(x, w_big, b_big, *, tile_rows=None, min_grid_steps=4,
                       precision=None):
    """Pallas path: y = GELU(x @ W.T + b) with pre-packed block-diagonal params.

    x: [N, 16] f32.  tile_rows: rows of the [R, 512] view per grid step
    (None -> generation-dependent default).  min_grid_steps keeps the grid long
    enough for double-buffering + v7x 2-TC balance.
    """
    n, d_in = x.shape
    assert d_in == _IN_FEATURES
    assert w_big.shape == (_PACKED_IN, _PACKED_OUT)
    assert b_big.shape == (1, _PACKED_OUT)
    if tile_rows is None:
        tile_rows = _default_tile_rows()
    assert tile_rows % 8 == 0 and tile_rows >= 8
    assert min_grid_steps >= 1

    # Lane-dense view: 32 consecutive x-rows per [., 512] row.
    rows = pl.cdiv(n, _PACK)
    n_grp = rows * _PACK
    if n_grp != n:
        # Pad only up to the next multiple of 32 rows so the reshape is valid.
        # (Aligned batches take the zero-copy fast path: no pad, no slice.)
        x = jnp.pad(x, ((0, n_grp - n), (0, 0)))
    x2d = x.reshape(rows, _PACKED_IN)        # free row-major reshape

    # Tile: biggest that fits scoped VMEM, capped so the grid keeps at least
    # min_grid_steps steps (pipelining + megacore balance).
    tile_budget = min(tile_rows,
                      max(8, pl.cdiv(pl.cdiv(rows, min_grid_steps), 8) * 8))
    if rows <= tile_budget:
        tile_r = rows                         # single full block (always legal)
    else:
        tile_r = tile_budget                  # multiple of 8; last block may be
                                              # partial -> Pallas masks the store
    grid = (pl.cdiv(rows, tile_r),)

    bytes_accessed = 4 * (rows * _PACKED_IN          # x stream
                          + _PACKED_IN * _PACKED_OUT  # resident weight
                          + _PACKED_OUT               # bias
                          + rows * _PACKED_OUT)       # y stream

    out2d = pl.pallas_call(
        _make_kernel(precision),
        out_shape=jax.ShapeDtypeStruct((rows, _PACKED_OUT), x.dtype),
        grid=grid,
        in_specs=[
            pl.BlockSpec((tile_r, _PACKED_IN), lambda i: (i, 0)),
            pl.BlockSpec((_PACKED_IN, _PACKED_OUT), lambda i: (0, 0)),  # resident
            pl.BlockSpec((1, _PACKED_OUT), lambda i: (0, 0)),           # resident
        ],
        out_specs=pl.BlockSpec((tile_r, _PACKED_OUT), lambda i: (i, 0)),
        compiler_params=pltpu.CompilerParams(
            # Batch axis is embarrassingly parallel: 2-TC sharding on v7x.
            dimension_semantics=("parallel",),
        ),
        cost_estimate=pl.CostEstimate(
            flops=2 * rows * _PACKED_IN * _PACKED_OUT,
            transcendentals=rows * _PACKED_OUT,
            bytes_accessed=bytes_accessed,
        ),
    )(x2d, w_big, b_big)

    out = out2d.reshape(n_grp, _OUT_FEATURES)   # free row-major reshape back
    return out if n_grp == n else out[:n]       # slice only when padding existed


def linear_gelu(x, w, b, *, tile_rows=None, min_grid_steps=4, use_pallas=None,
                precision=None):
    """y = GELU(x @ w.T + b);  x: [N, 16], w: [4, 16] (PyTorch layout), b: [4]."""
    n = x.shape[0]
    if use_pallas is None:
        # Tiny batches are pure launch overhead for a Pallas kernel; let XLA fuse.
        use_pallas = n >= 4096
    if not use_pallas:
        return jax.nn.gelu(x.astype(jnp.float32) @ w.T.astype(jnp.float32)
                           + b.astype(jnp.float32), approximate=False)
    w_big, b_big = pack_linear_gelu_params(w, b)
    return linear_gelu_packed(x, w_big, b_big, tile_rows=tile_rows,
                              min_grid_steps=min_grid_steps, precision=precision)


if __name__ == "__main__":
    key = jax.random.PRNGKey(0)
    k_x, k_w, k_b = jax.random.split(key, 3)

    # Deterministic parameter init mimicking nn.Linear(16, 4) default init:
    # uniform(-1/sqrt(in_features), 1/sqrt(in_features)), PyTorch (out, in) layout.
    in_features, out_features = 16, 4
    bound = 1.0 / math.sqrt(in_features)
    w = jax.random.uniform(k_w, (out_features, in_features), jnp.float32,
                           -bound, bound)
    b = jax.random.uniform(k_b, (out_features,), jnp.float32, -bound, bound)

    def ref(xv):
        return jax.nn.gelu(xv @ w.T + b, approximate=False)

    # Pack the block-diagonal weight/bias ONCE (hoisted out of the per-call path).
    w_big, b_big = pack_linear_gelu_params(w, b)

    # 1) Small batch consistent with the module: 8 vectors of dim 16
    #    (single-block Pallas path, padded only to one 32-row group).
    x_small = jax.random.normal(k_x, (8, in_features), jnp.float32)
    out_small = jax.block_until_ready(
        linear_gelu_packed(x_small, w_big, b_big, tile_rows=8))
    assert jnp.allclose(out_small, ref(x_small), atol=1e-5, rtol=1e-5), \
        "small-batch mismatch vs reference"

    # 2) Non-multiple-of-32 batch, multi-step grid with a PARTIAL last block
    #    (pl.cdiv grid + masked store instead of whole-tile padding).
    x_big = jax.random.normal(k_x, (1000, in_features), jnp.float32)
    out_big = jax.block_until_ready(
        linear_gelu_packed(x_big, w_big, b_big, tile_rows=24, min_grid_steps=1))
    assert jnp.allclose(out_big, ref(x_big), atol=1e-5, rtol=1e-5), \
        "partial-block mismatch vs reference"

    # 3) Aligned batch (multiple of 32): zero-copy fast path — no jnp.pad,
    #    no trailing [:n] slice, multi-step grid, default tile selection.
    x_aln = jax.random.normal(k_x, (2048, in_features), jnp.float32)
    out_aln = jax.block_until_ready(linear_gelu_packed(x_aln, w_big, b_big))
    assert jnp.allclose(out_aln, ref(x_aln), atol=1e-5, rtol=1e-5), \
        "aligned-batch mismatch vs reference"

    print("KERNEL_OK")
</pallas_src>

<mosaic_0001>
module attributes {stable_mosaic.version = 11 : i64} {
  func.func @_linear_gelu_kernel(%arg0: i32, %arg1: memref<1x512xf32, #tpu.memory_space<vmem>>, %arg2: memref<512x128xf32, #tpu.memory_space<vmem>>, %arg3: memref<1x128xf32, #tpu.memory_space<vmem>>, %arg4: memref<1x128xf32, #tpu.memory_space<vmem>>) attributes {dimension_semantics = [#tpu.dimension_semantics<parallel>], iteration_bounds = array<i64: 1>, scalar_prefetch = 0 : i64, scratch_operands = 0 : i64, tpu.core_type = #tpu.core_type<tc>, window_params = [{transform_indices = @transform_0, window_bounds = array<i64: 1, 512>}, {pipeline_mode = #tpu.pipeline_mode<synchronous>, transform_indices = @transform_1, window_bounds = array<i64: 512, 128>}, {pipeline_mode = #tpu.pipeline_mode<synchronous>, transform_indices = @transform_2, window_bounds = array<i64: 1, 128>}, {transform_indices = @transform_3, window_bounds = array<i64: 1, 128>}]} {
    %c0 = arith.constant 0 : index
    %c0_0 = arith.constant 0 : index
    %0 = vector.load %arg1[%c0, %c0_0] : memref<1x512xf32, #tpu.memory_space<vmem>>, vector<1x512xf32>
    %c0_1 = arith.constant 0 : index
    %c0_2 = arith.constant 0 : index
    %1 = vector.load %arg2[%c0_1, %c0_2] : memref<512x128xf32, #tpu.memory_space<vmem>>, vector<512x128xf32>
    %cst = arith.constant dense<0.000000e+00> : vector<1x128xf32>
    %2 = tpu.matmul %0, %1, %cst {dimension_numbers = #tpu.dot_dimension_numbers<[1], [0], [0], [1], [0, 0, 1, 1], [], []>} : vector<1x512xf32>, vector<512x128xf32>, vector<1x128xf32> -> vector<1x128xf32>
    %c0_3 = arith.constant 0 : index
    %c0_4 = arith.constant 0 : index
    %3 = vector.load %arg3[%c0_3, %c0_4] : memref<1x128xf32, #tpu.memory_space<vmem>>, vector<1x128xf32>
    %4 = arith.addf %2, %3 : vector<1x128xf32>
    %cst_5 = arith.constant 5.000000e-01 : f32
    %5 = vector.broadcast %cst_5 : f32 to vector<1x128xf32>
    %6 = arith.mulf %5, %4 : vector<1x128xf32>
    %cst_6 = arith.constant 0.707106769 : f32
    %7 = vector.broadcast %cst_6 : f32 to vector<1x128xf32>
    %8 = arith.mulf %4, %7 : vector<1x128xf32>
    %9 = math.erf %8 : vector<1x128xf32>
    %cst_7 = arith.constant 1.000000e+00 : f32
    %10 = vector.broadcast %cst_7 : f32 to vector<1x128xf32>
    %11 = arith.addf %10, %9 : vector<1x128xf32>
    %12 = arith.mulf %6, %11 : vector<1x128xf32>
    %c0_8 = arith.constant 0 : index
    %c0_9 = arith.constant 0 : index
    %13 = vector.load %arg4[%c0_8, %c0_9] : memref<1x128xf32, #tpu.memory_space<vmem>>, vector<1x128xf32>
    tpu.vector_store %arg4[%c0_8, %c0_9], %12 {strides = array<i32>} : memref<1x128xf32, #tpu.memory_space<vmem>>, vector<1x128xf32>,
    return
  }
  func.func @transform_0(%arg0: i32) -> (i32, i32) {
    %c0_i32 = arith.constant 0 : i32
    %c0_i32_0 = arith.constant 0 : i32
    return %arg0, %c0_i32 : i32, i32
  }
  func.func @transform_1(%arg0: i32) -> (i32, i32) {
    %c0_i32 = arith.constant 0 : i32
    %c0_i32_0 = arith.constant 0 : i32
    %c0_i32_1 = arith.constant 0 : i32
    return %c0_i32, %c0_i32_0 : i32, i32
  }
  func.func @transform_2(%arg0: i32) -> (i32, i32) {
    %c0_i32 = arith.constant 0 : i32
    %c0_i32_0 = arith.constant 0 : i32
    %c0_i32_1 = arith.constant 0 : i32
    return %c0_i32, %c0_i32_0 : i32, i32
  }
  func.func @transform_3(%arg0: i32) -> (i32, i32) {
    %c0_i32 = arith.constant 0 : i32
    %c0_i32_0 = arith.constant 0 : i32
    return %arg0, %c0_i32 : i32, i32
  }
}

</mosaic_0001>

<llo_original>
// kernel: tpu_custom_call.1
$region0: #{tpu_custom_call.1}
  #allocation0 [shape = 'u32[]', space=smem, size = 0x4, offset = 0x4, fixed_abs, tag = 'smem constant byte address 0x4 - core index']
  #allocation1 [shape = 'u32[144,128]{1,0:T(1,128)}', space=vmem, size = 0x12000, scoped, tag = 'internal scratch']
  %s0 = inlined_call_operand.hbm [shape: f32[1,512], index: 0, kind: input, shape index: {}]
  %s1 = inlined_call_operand.hbm [shape: f32[512,128], index: 1, kind: input, shape index: {}]
  %s2 = inlined_call_operand.vmem [shape: f32[1,128], index: 2, kind: input, shape index: {}]
  %s3 = inlined_call_operand.hbm [shape: f32[1,128], index: 3, kind: output, shape index: {}]
  %s4 = sld [smem:[#allocation0]]
  $region30: #{tpu_custom_call.1} parent=0
    _
  %s6 = ssub.s32 1, %s4
  %s7 = scalar_select 0, %s6, %s4
  $region1: #{tpu_custom_call.1} parent=0
    #allocation2 [shape = 'u8[2048]{0}', space=vmem, size = 0x800, scoped, tag = 'input window, operand 0, single buffered']
    #allocation3 [shape = 's32[1]{0}', space=sflag, size = 0x4, scoped, tag = 'scoped memory for tpu_custom_call.1']
    #allocation4 [shape = 's32[1]{0}', space=sflag, size = 0x4, scoped, tag = 'scoped memory for tpu_custom_call.1']
    #allocation5 [shape = 'u8[262144]{0}', space=vmem, size = 0x40000, scoped, tag = 'input window, operand 1, single buffered']
    #allocation6 [shape = 's32[1]{0}', space=sflag, size = 0x4, scoped, tag = 'scoped memory for tpu_custom_call.1']
    #allocation7 [shape = 'u8[512]{0}', space=vmem, size = 0x400, scoped, tag = 'output window, operand 0, single buffered']
    %8 = vsyncpa [#allocation3], 0
    %9 = vsyncpa [#allocation6], 0
    %10 = vsyncpa [#allocation4], 0
    // Predicated region
    $region2: #{tpu_custom_call.1} parent=1 // pred_check
      _
    $region3: #{tpu_custom_call.1} parent=1 // pred_check_branch
      %12 = sbr.rel (0) target = $region5
    $region4: #{tpu_custom_call.1} parent=1 // pred_region
      %s14 = ssub.s32 64, 64
      %15 = vsyncadd [#allocation3], %s14
      %s17 = sshll.u32 [#allocation2], 4
      %s18 = int_to_ptr.vmem [resolvable:$true] %s17
      %20 = dma.hbm_to_vmem [thread:$0]  %s0, 64, %s18, [#allocation3]
    $region5: #{tpu_custom_call.1} parent=1 // pred_fallthru
      _
    // Predicated region
    $region6: #{tpu_custom_call.1} parent=1 // pred_check
      _
    $region7: #{tpu_custom_call.1} parent=1 // pred_check_branch
      %22 = sbr.rel (0) target = $region9
    $region8: #{tpu_custom_call.1} parent=1 // pred_region
      %s24 = ssub.s32 8192, 8192
      %25 = vsyncadd [#allocation6], %s24
      %s26 = sshll.u32 [#allocation5], 4
      %s27 = int_to_ptr.vmem [resolvable:$true] %s26
      %32 = dma.hbm_to_vmem [thread:$0]  %s1, 8192, %s27, [#allocation6], 128, 128, 8
    $region9: #{tpu_custom_call.1} parent=1 // pred_fallthru
      _
    // Predicated region
    $region10: #{tpu_custom_call.1} parent=1 // pred_check
      _
    $region11: #{tpu_custom_call.1} parent=1 // pred_check_branch
      %34 = sbr.rel (0) target = $region13
    $region12: #{tpu_custom_call.1} parent=1 // pred_region
      _
    $region13: #{tpu_custom_call.1} parent=1 // pred_fallthru
      _
    // Predicated region
    $region14: #{tpu_custom_call.1} parent=1 // pred_check
      _
    $region15: #{tpu_custom_call.1} parent=1 // pred_check_branch
      %36 = sbr.rel (0) target = $region17
    $region16: #{tpu_custom_call.1} parent=1 // pred_region
      %37 = dma.done [#allocation3], 64
    $region17: #{tpu_custom_call.1} parent=1 // pred_fallthru
      _
    // Predicated region
    $region18: #{tpu_custom_call.1} parent=1 // pred_check
      _
    $region19: #{tpu_custom_call.1} parent=1 // pred_check_branch
      %39 = sbr.rel (0) target = $region21
    $region20: #{tpu_custom_call.1} parent=1 // pred_region
      %40 = dma.done [#allocation6], 8192
    $region21: #{tpu_custom_call.1} parent=1 // pred_fallthru
      _
    %v41 = vld [vmem:[#allocation2] sm:$0xf]
    %v42 = vld [vmem:[#allocation5] sm:$0xff]
    %v43 = vld [vmem:[#allocation5 + $0x8] sm:$0xff]
    %v44 = vld [vmem:[#allocation5 + $0x10] sm:$0xff]
    %v45 = vld [vmem:[#allocation5 + $0x18] sm:$0xff]
    %v46 = vld [vmem:[#allocation5 + $0x20] sm:$0xff]
    %v47 = vld [vmem:[#allocation5 + $0x28] sm:$0xff]
    %v48 = vld [vmem:[#allocation5 + $0x30] sm:$0xff]
    %v49 = vld [vmem:[#allocation5 + $0x38] sm:$0xff]
    %v50 = vld [vmem:[#allocation5 + $0x40] sm:$0xff]
    %v51 = vld [vmem:[#allocation5 + $0x48] sm:$0xff]
    %v52 = vld [vmem:[#allocation5 + $0x50] sm:$0xff]
    %v53 = vld [vmem:[#allocation5 + $0x58] sm:$0xff]
    %v54 = vld [vmem:[#allocation5 + $0x60] sm:$0xff]
    %v55 = vld [vmem:[#allocation5 + $0x68] sm:$0xff]
    %v56 = vld [vmem:[#allocation5 + $0x70] sm:$0xff]
    %v57 = vld [vmem:[#allocation5 + $0x78] sm:$0xff]
    %v58 = vld [vmem:[#allocation5 + $0x80] sm:$0xff]
    %v59 = vld [vmem:[#allocation5 + $0x88] sm:$0xff]
    %v60 = vld [vmem:[#allocation5 + $0x90] sm:$0xff]
    %v61 = vld [vmem:[#allocation5 + $0x98] sm:$0xff]
    %v62 = vld [vmem:[#allocation5 + $0xa0] sm:$0xff]
    %v63 = vld [vmem:[#allocation5 + $0xa8] sm:$0xff]
    %v64 = vld [vmem:[#allocation5 + $0xb0] sm:$0xff]
    %v65 = vld [vmem:[#allocation5 + $0xb8] sm:$0xff]
    %v66 = vld [vmem:[#allocation5 + $0xc0] sm:$0xff]
    %v67 = vld [vmem:[#allocation5 + $0xc8] sm:$0xff]
    %v68 = vld [vmem:[#allocation5 + $0xd0] sm:$0xff]
    %v69 = vld [vmem:[#allocation5 + $0xd8] sm:$0xff]
    %v70 = vld [vmem:[#allocation5 + $0xe0] sm:$0xff]
    %v71 = vld [vmem:[#allocation5 + $0xe8] sm:$0xff]
    %v72 = vld [vmem:[#allocation5 + $0xf0] sm:$0xff]
    %v73 = vld [vmem:[#allocation5 + $0xf8] sm:$0xff]
    %v74 = vld [vmem:[#allocation5 + $0x100] sm:$0xff]
    %v75 = vld [vmem:[#allocation5 + $0x108] sm:$0xff]
    %v76 = vld [vmem:[#allocation5 + $0x110] sm:$0xff]
    %v77 = vld [vmem:[#allocation5 + $0x118] sm:$0xff]
    %v78 = vld [vmem:[#allocation5 + $0x120] sm:$0xff]
    %v79 = vld [vmem:[#allocation5 + $0x128] sm:$0xff]
    %v80 = vld [vmem:[#allocation5 + $0x130] sm:$0xff]
    %v81 = vld [vmem:[#allocation5 + $0x138] sm:$0xff]
    %v82 = vld [vmem:[#allocation5 + $0x140] sm:$0xff]
    %v83 = vld [vmem:[#allocation5 + $0x148] sm:$0xff]
    %v84 = vld [vmem:[#allocation5 + $0x150] sm:$0xff]
    %v85 = vld [vmem:[#allocation5 + $0x158] sm:$0xff]
    %v86 = vld [vmem:[#allocation5 + $0x160] sm:$0xff]
    %v87 = vld [vmem:[#allocation5 + $0x168] sm:$0xff]
    %v88 = vld [vmem:[#allocation5 + $0x170] sm:$0xff]
    %v89 = vld [vmem:[#allocation5 + $0x178] sm:$0xff]
    %v90 = vld [vmem:[#allocation5 + $0x180] sm:$0xff]
    %v91 = vld [vmem:[#allocation5 + $0x188] sm:$0xff]
    %v92 = vld [vmem:[#allocation5 + $0x190] sm:$0xff]
    %v93 = vld [vmem:[#allocation5 + $0x198] sm:$0xff]
    %v94 = vld [vmem:[#allocation5 + $0x1a0] sm:$0xff]
    %v95 = vld [vmem:[#allocation5 + $0x1a8] sm:$0xff]
    %v96 = vld [vmem:[#allocation5 + $0x1b0] sm:$0xff]
    %v97 = vld [vmem:[#allocation5 + $0x1b8] sm:$0xff]
    %v98 = vld [vmem:[#allocation5 + $0x1c0] sm:$0xff]
    %v99 = vld [vmem:[#allocation5 + $0x1c8] sm:$0xff]
    %v100 = vld [vmem:[#allocation5 + $0x1d0] sm:$0xff]
    %v101 = vld [vmem:[#allocation5 + $0x1d8] sm:$0xff]
    %v102 = vld [vmem:[#allocation5 + $0x1e0] sm:$0xff]
    %v103 = vld [vmem:[#allocation5 + $0x1e8] sm:$0xff]
    %v104 = vld [vmem:[#allocation5 + $0x1f0] sm:$0xff]
    %v105 = vld [vmem:[#allocation5 + $0x1f8] sm:$0xff]
    %v106 = vld [vmem:[%s2] sm:$0x1]
    %v108 = vlaneseq
    %v109 = vshrl.u32 %v108, 7
    %v110 = vsub.s32 0, %v109
    %v111 = vrot.slane %v41, %v110
    %v112 = vlaneseq
    %v113 = vshrl.u32 %v112, 7
    %v114 = vsub.s32 1, %v113
    %v115 = vrot.slane %v41, %v114
    %v116 = vlaneseq
    %v117 = vshrl.u32 %v116, 7
    %v118 = vsub.s32 2, %v117
    %v119 = vrot.slane %v41, %v118
    %v120 = vlaneseq
    %v121 = vshrl.u32 %v120, 7
    %v122 = vsub.s32 3, %v121
    %v123 = vrot.slane %v41, %v122
    %128 = vmatprep.subr.mxu0 0.0
    %129 = vmatpush1.msra.mxu0 %v42
    %130 = vmatprep.subr.mxu0 0.0
    %131 = vmatpush1.msra.mxu0 %v43
    %132 = vmatprep.subr.mxu0 0.0
    %133 = vmatpush1.msra.mxu0 %v44
    %134 = vmatprep.subr.mxu0 0.0
    %135 = vmatpush1.msra.mxu0 %v45
    %136 = vmatprep.subr.mxu0 0.0
    %137 = vmatpush1.msra.mxu0 %v46
    %138 = vmatprep.subr.mxu0 0.0
    %139 = vmatpush1.msra.mxu0 %v47
    %140 = vmatprep.subr.mxu0 0.0
    %141 = vmatpush1.msra.mxu0 %v48
    %142 = vmatprep.subr.mxu0 0.0
    %143 = vmatpush1.msra.mxu0 %v49
    %144 = vmatprep.subr.mxu0 0.0
    %145 = vmatpush1.msra.mxu0 %v50
    %146 = vmatprep.subr.mxu0 0.0
    %147 = vmatpush1.msra.mxu0 %v51
    %148 = vmatprep.subr.mxu0 0.0
    %149 = vmatpush1.msra.mxu0 %v52
    %150 = vmatprep.subr.mxu0 0.0
    %151 = vmatpush1.msra.mxu0 %v53
    %152 = vmatprep.subr.mxu0 0.0
    %153 = vmatpush1.msra.mxu0 %v54
    %154 = vmatprep.subr.mxu0 0.0
    %155 = vmatpush1.msra.mxu0 %v55
    %156 = vmatprep.subr.mxu0 0.0
    %157 = vmatpush1.msra.mxu0 %v56
    %158 = vmatprep.subr.mxu0 0.0
    %159 = vmatpush1.msra.mxu0 %v57
    %160 = vmatprep.subr.mxu0 0.0
    %161 = vmatpush1.msra.mxu0 %v58
    %162 = vmatprep.subr.mxu0 0.0
    %163 = vmatpush1.msra.mxu0 %v59
    %164 = vmatprep.subr.mxu0 0.0
    %165 = vmatpush1.msra.mxu0 %v60
    %166 = vmatprep.subr.mxu0 0.0
    %167 = vmatpush1.msra.mxu0 %v61
    %168 = vmatprep.subr.mxu0 0.0
    %169 = vmatpush1.msra.mxu0 %v62
    %170 = vmatprep.subr.mxu0 0.0
    %171 = vmatpush1.msra.mxu0 %v63
    %172 = vmatprep.subr.mxu0 0.0
    %173 = vmatpush1.msra.mxu0 %v64
    %174 = vmatprep.subr.mxu0 0.0
    %175 = vmatpush1.msra.mxu0 %v65
    %176 = vmatprep.subr.mxu0 0.0
    %177 = vmatpush1.msra.mxu0 %v66
    %178 = vmatprep.subr.mxu0 0.0
    %179 = vmatpush1.msra.mxu0 %v67
    %180 = vmatprep.subr.mxu0 0.0
    %181 = vmatpush1.msra.mxu0 %v68
    %182 = vmatprep.subr.mxu0 0.0
    %183 = vmatpush1.msra.mxu0 %v69
    %184 = vmatprep.subr.mxu0 0.0
    %185 = vmatpush1.msra.mxu0 %v70
    %186 = vmatprep.subr.mxu0 0.0
    %187 = vmatpush1.msra.mxu0 %v71
    %188 = vmatprep.subr.mxu0 0.0
    %189 = vmatpush1.msra.mxu0 %v72
    %190 = vmatprep.subr.mxu0 0.0
    %191 = vmatpush1.msra.mxu0 %v73
    %192 = vmatprep.mubr.f32.mxu0 %v115
    %193 = vmatmul.mubr.f32.gmra.mrb[0].mxu0 %v111
    %v194 = vpop.f32.mrb[0].mxu0
    %v195 = vadd.f32 %v106, %v194
    %v196 = vpop.f32.mrb[0].mxu0
    %197 = vdwg.mxu0
    %198 = vmatprep.subr.mxu0 0.0
    %199 = vmatpush1.msra.mxu0 %v74
    %200 = vmatprep.subr.mxu0 0.0
    %201 = vmatpush1.msra.mxu0 %v75
    %202 = vmatprep.subr.mxu0 0.0
    %203 = vmatpush1.msra.mxu0 %v76
    %204 = vmatprep.subr.mxu0 0.0
    %205 = vmatpush1.msra.mxu0 %v77
    %206 = vmatprep.subr.mxu0 0.0
    %207 = vmatpush1.msra.mxu0 %v78
    %208 = vmatprep.subr.mxu0 0.0
    %209 = vmatpush1.msra.mxu0 %v79
    %210 = vmatprep.subr.mxu0 0.0
    %211 = vmatpush1.msra.mxu0 %v80
    %212 = vmatprep.subr.mxu0 0.0
    %213 = vmatpush1.msra.mxu0 %v81
    %214 = vmatprep.subr.mxu0 0.0
    %215 = vmatpush1.msra.mxu0 %v82
    %216 = vmatprep.subr.mxu0 0.0
    %217 = vmatpush1.msra.mxu0 %v83
    %218 = vmatprep.subr.mxu0 0.0
    %219 = vmatpush1.msra.mxu0 %v84
    %220 = vmatprep.subr.mxu0 0.0
    %221 = vmatpush1.msra.mxu0 %v85
    %222 = vmatprep.subr.mxu0 0.0
    %223 = vmatpush1.msra.mxu0 %v86
    %224 = vmatprep.subr.mxu0 0.0
    %225 = vmatpush1.msra.mxu0 %v87
    %226 = vmatprep.subr.mxu0 0.0
    %227 = vmatpush1.msra.mxu0 %v88
    %228 = vmatprep.subr.mxu0 0.0
    %229 = vmatpush1.msra.mxu0 %v89
    %230 = vmatprep.subr.mxu0 0.0
    %231 = vmatpush1.msra.mxu0 %v90
    %232 = vmatprep.subr.mxu0 0.0
    %233 = vmatpush1.msra.mxu0 %v91
    %234 = vmatprep.subr.mxu0 0.0
    %235 = vmatpush1.msra.mxu0 %v92
    %236 = vmatprep.subr.mxu0 0.0
    %237 = vmatpush1.msra.mxu0 %v93
    %238 = vmatprep.subr.mxu0 0.0
    %239 = vmatpush1.msra.mxu0 %v94
    %240 = vmatprep.subr.mxu0 0.0
    %241 = vmatpush1.msra.mxu0 %v95
    %242 = vmatprep.subr.mxu0 0.0
    %243 = vmatpush1.msra.mxu0 %v96
    %244 = vmatprep.subr.mxu0 0.0
    %245 = vmatpush1.msra.mxu0 %v97
    %246 = vmatprep.subr.mxu0 0.0
    %247 = vmatpush1.msra.mxu0 %v98
    %248 = vmatprep.subr.mxu0 0.0
    %249 = vmatpush1.msra.mxu0 %v99
    %250 = vmatprep.subr.mxu0 0.0
    %251 = vmatpush1.msra.mxu0 %v100
    %252 = vmatprep.subr.mxu0 0.0
    %253 = vmatpush1.msra.mxu0 %v101
    %254 = vmatprep.subr.mxu0 0.0
    %255 = vmatpush1.msra.mxu0 %v102
    %256 = vmatprep.subr.mxu0 0.0
    %257 = vmatpush1.msra.mxu0 %v103
    %258 = vmatprep.subr.mxu0 0.0
    %259 = vmatpush1.msra.mxu0 %v104
    %260 = vmatprep.subr.mxu0 0.0
    %261 = vmatpush1.msra.mxu0 %v105
    %262 = vmatprep.mubr.f32.mxu0 %v123
    %263 = vmatmul.mubr.f32.gmra.mrb[0].mxu0 %v119
    %v264 = vpop.f32.mrb[0].mxu0
    %v265 = vadd.f32 %v195, %v264
    %v266 = vpop.f32.mrb[0].mxu0
    %267 = vdwg.mxu0
    %v268 = vmul.f32 %v265, 0.5
    %v269 = vmul.f32 %v265, 0.70710677
    %v270 = verf.f32.pop %v269
    %v271 = vadd.f32 %v270, 1.0
    %v272 = vmul.f32 %v268, %v271
    %273 = vst [vmem:[#allocation7] sm:$0x1] %v272
    // Predicated region
    $region22: #{tpu_custom_call.1} parent=1 // pred_check
      _
    $region23: #{tpu_custom_call.1} parent=1 // pred_check_branch
      %275 = sbr.rel (0) target = $region25
    $region24: #{tpu_custom_call.1} parent=1 // pred_region
      %s277 = ssub.s32 16, 16
      %278 = vsyncadd [#allocation4], %s277
      %s280 = sshll.u32 [#allocation7], 4
      %s281 = int_to_ptr.vmem [resolvable:$true] %s280
      %283 = dma.vmem_to_hbm [thread:$0]  %s281, 16, %s3, [#allocation4]
    $region25: #{tpu_custom_call.1} parent=1 // pred_fallthru
      _
    // Predicated region
    $region26: #{tpu_custom_call.1} parent=1 // pred_check
      _
    $region27: #{tpu_custom_call.1} parent=1 // pred_check_branch
      %285 = sbr.rel (0) target = $region29
    $region28: #{tpu_custom_call.1} parent=1 // pred_region
      %286 = dma.done [#allocation4], 16
    $region29: #{tpu_custom_call.1} parent=1 // pred_fallthru
      _
    %287 = vsyncpa [#allocation3], 1
    %288 = vsyncpa [#allocation6], 1
    %289 = vsyncpa [#allocation4], 1

</llo_original>
